<compile_context>
chip_gen: v5e
topology: v5e:2x2
jax: 0.10.0
libtpu: 0.0.40
codegen_flags: <defaults>
</compile_context>

<pallas_src>
import jax
import jax.numpy as jnp
import numpy as np
from jax.experimental import pallas as pl
from jax.experimental.pallas import tpu as pltpu

EMB_DIM = 32          # emb_dim
NUM_LAYERS = 3        # num_gc_layers (small for the synthetic test)
BN_EPS = 1e-5


# ----------------------------- Pallas kernel -------------------------------

def _batchnorm_train(v, gamma, beta):
    """BatchNorm1d with batch statistics, one reduction pass + folded affine.

    var = E[v^2] - E[v]^2 (single pass over v), then gamma * rsqrt(var + eps)
    is folded into one per-channel scale and (beta - mu * scale) into one
    shift, so the normalize is a single multiply-add per element on the VPU
    (rsqrt goes to the EUP slot).
    """
    inv_n = 1.0 / v.shape[0]
    s1 = jnp.sum(v, axis=0, keepdims=True)
    s2 = jnp.sum(v * v, axis=0, keepdims=True)
    mu = s1 * inv_n
    var = s2 * inv_n - mu * mu
    scale = gamma * jax.lax.rsqrt(var + BN_EPS)
    shift = beta - mu * scale
    return v * scale + shift


def node_encoder_kernel(x_ref, ea_ref, gat_ref, sct_ref, pmat_ref,
                        w1_ref, b1_ref, g1_ref, bt1_ref,
                        w2_ref, b2_ref, g2_ref, bt2_ref,
                        xpool_ref, xout_ref):
    # Everything (node feats, edge feats, one-hot graph structure and all
    # stacked layer parameters) is VMEM-resident for the entire forward pass.
    x = x_ref[...]                                       # (N, D)  f32
    ea = ea_ref[...]                                     # (E, D)  f32
    # One-hot matrices arrive as bf16 (exact for 0/1); widen ONCE, hoisted
    # outside the layer loop.
    gat = gat_ref[...].astype(jnp.float32)               # (E, N)  gather  src
    sct = sct_ref[...].astype(jnp.float32)               # (E, N)  scatter dst
    pmat = pmat_ref[...].astype(jnp.float32)             # (N, B)  pool

    num_layers = w1_ref.shape[0]
    for i in range(num_layers):                          # static, unrolled
        # --- GINEConv message passing (dense one-hot form, MXU matmuls) ---
        x_src = jnp.dot(gat, x, preferred_element_type=jnp.float32)      # (E, D)
        msg = jnp.maximum(x_src + ea, 0.0)
        # scatter-add onto dst: contract the edge axis (axis 0 of both), so the
        # (E, N) one-hot never needs a transpose in HBM or VMEM.
        aggr = jax.lax.dot_general(sct, msg, (((0,), (0,)), ((), ())),
                                   preferred_element_type=jnp.float32)   # (N, D)
        h = x + aggr                                     # (1+eps)*x + aggr, eps=0

        # --- GIN MLP: Linear(D,2D) -> BN(2D, batch stats) -> ReLU -> Linear(2D,D)
        z = jnp.dot(h, w1_ref[i], preferred_element_type=jnp.float32) + b1_ref[i]
        z = jnp.maximum(_batchnorm_train(z, g1_ref[i], bt1_ref[i]), 0.0)
        y = jnp.dot(z, w2_ref[i], preferred_element_type=jnp.float32) + b2_ref[i]

        # --- outer BatchNorm1d(D) (batch stats); ReLU on all but the last layer
        y = _batchnorm_train(y, g2_ref[i], bt2_ref[i])
        if i < num_layers - 1:
            y = jnp.maximum(y, 0.0)
        # drop_ratio = 0.0 -> F.dropout is the identity (train and eval).
        x = y

    xout_ref[...] = x
    # global_add_pool: contract the node axis of the untransposed (N, B) one-hot.
    xpool_ref[...] = jax.lax.dot_general(pmat, x, (((0,), (0,)), ((), ())),
                                         preferred_element_type=jnp.float32)


# ------------------------------ JAX wrapper ---------------------------------

def _vmem_spec():
    return pl.BlockSpec(memory_space=pltpu.MemorySpace.VMEM)


def node_encoder_forward(batch, x_int, edge_index, edge_attr_int,
                         atom_tables, bond_tables, layer_params, num_graphs):
    n = x_int.shape[0]
    d = atom_tables[0].shape[1]

    # AtomEncoder / BondEncoder: sum of per-feature embedding lookups (glue).
    # TODO(synk): embedding gather stays in plain JAX; no clean Pallas gather here.
    x = sum(t[x_int[:, i]] for i, t in enumerate(atom_tables))
    ea = sum(t[edge_attr_int[:, i]] for i, t in enumerate(bond_tables))

    # Graph structure as one-hot matrices: bf16 (exact for 0/1, half the DMA
    # bytes) and NO wrapper-side transposes (kernel contracts over axis 0).
    # TODO(synk): for large graphs replace the O(E*N) dense one-hot form with
    # index-based gather/scatter via scalar-prefetched edge_index (v7x VMEM).
    gat = jax.nn.one_hot(edge_index[0], n, dtype=jnp.bfloat16)         # (E, N)
    sct = jax.nn.one_hot(edge_index[1], n, dtype=jnp.bfloat16)         # (E, N)
    pmat = jax.nn.one_hot(batch, num_graphs, dtype=jnp.bfloat16)       # (N, B)

    # Stack per-layer parameters along a leading layer axis so the whole
    # forward (all layers + pooling) is a single pallas_call.
    stk = lambda k: jnp.stack([p[k] for p in layer_params], axis=0)
    args = (x, ea, gat, sct, pmat,
            stk("w1"), stk("b1"), stk("g1"), stk("bt1"),
            stk("w2"), stk("b2"), stk("g2"), stk("bt2"))

    xpool, x_out = pl.pallas_call(
        node_encoder_kernel,
        out_shape=(jax.ShapeDtypeStruct((num_graphs, d), jnp.float32),
                   jax.ShapeDtypeStruct((n, d), jnp.float32)),
        in_specs=[_vmem_spec() for _ in range(len(args))],
        out_specs=(_vmem_spec(), _vmem_spec()),
    )(*args)
    return xpool, x_out


# --------------------------- parameter utilities ----------------------------

def xavier_uniform(key, shape):
    fan_in, fan_out = shape[0], shape[1]
    bound = float(np.sqrt(6.0 / (fan_in + fan_out)))
    return jax.random.uniform(key, shape, jnp.float32, -bound, bound)


# ------------------------------- reference ----------------------------------

def node_encoder_reference(batch, x_int, edge_index, edge_attr_int,
                           atom_tables, bond_tables, layer_params, num_graphs):
    n = x_int.shape[0]
    x = sum(t[x_int[:, i]] for i, t in enumerate(atom_tables))
    ea = sum(t[edge_attr_int[:, i]] for i, t in enumerate(bond_tables))
    for i, p in enumerate(layer_params):
        msg = jnp.maximum(x[edge_index[0]] + ea, 0.0)
        aggr = jax.ops.segment_sum(msg, edge_index[1], n)
        h = x + aggr
        z = h @ p["w1"] + p["b1"]
        mu = z.mean(0, keepdims=True)
        var = ((z - mu) ** 2).mean(0, keepdims=True)
        z = jnp.maximum((z - mu) / jnp.sqrt(var + BN_EPS) * p["g1"] + p["bt1"], 0.0)
        y = z @ p["w2"] + p["b2"]
        mu2 = y.mean(0, keepdims=True)
        var2 = ((y - mu2) ** 2).mean(0, keepdims=True)
        y = (y - mu2) / jnp.sqrt(var2 + BN_EPS) * p["g2"] + p["bt2"]
        x = jnp.maximum(y, 0.0) if i < len(layer_params) - 1 else y
    xpool = jax.ops.segment_sum(x, batch, num_graphs)
    return xpool, x


# ----------------------------------- main ------------------------------------

if __name__ == "__main__":
    key = jax.random.PRNGKey(0)
    keys = iter(jax.random.split(key, 64))

    D = EMB_DIM
    N, E, B = 16, 32, 2                 # nodes, edges, graphs
    ATOM_VOCABS = (10, 5, 7)            # synthetic AtomEncoder feature vocabularies
    BOND_VOCABS = (4, 6)                # synthetic BondEncoder feature vocabularies

    # Deterministic parameter init (xavier_uniform weights, zero biases,
    # BatchNorm gamma=1 / beta=0), mirroring NodeEncoder.init_emb().
    atom_tables = [xavier_uniform(next(keys), (v, D)) for v in ATOM_VOCABS]
    bond_tables = [xavier_uniform(next(keys), (v, D)) for v in BOND_VOCABS]
    layer_params = []
    for _ in range(NUM_LAYERS):
        layer_params.append({
            "w1": xavier_uniform(next(keys), (D, 2 * D)),
            "b1": jnp.zeros((1, 2 * D), jnp.float32),
            "g1": jnp.ones((1, 2 * D), jnp.float32),
            "bt1": jnp.zeros((1, 2 * D), jnp.float32),
            "w2": xavier_uniform(next(keys), (2 * D, D)),
            "b2": jnp.zeros((1, D), jnp.float32),
            "g2": jnp.ones((1, D), jnp.float32),
            "bt2": jnp.zeros((1, D), jnp.float32),
        })

    # Synthetic graph inputs.
    x_int = jnp.stack(
        [jax.random.randint(next(keys), (N,), 0, v) for v in ATOM_VOCABS], axis=1)
    edge_attr_int = jnp.stack(
        [jax.random.randint(next(keys), (E,), 0, v) for v in BOND_VOCABS], axis=1)
    edge_index = jax.random.randint(next(keys), (2, E), 0, N)
    batch = jnp.sort(jax.random.randint(next(keys), (N,), 0, B))

    xpool, x_nodes = node_encoder_forward(
        batch, x_int, edge_index, edge_attr_int,
        atom_tables, bond_tables, layer_params, B)
    jax.block_until_ready((xpool, x_nodes))

    xpool_ref, x_ref = node_encoder_reference(
        batch, x_int, edge_index, edge_attr_int,
        atom_tables, bond_tables, layer_params, B)
    assert jnp.allclose(x_nodes, x_ref, rtol=1e-3, atol=1e-3), "node emb mismatch"
    assert jnp.allclose(xpool, xpool_ref, rtol=1e-3, atol=1e-3), "pool mismatch"

    print("KERNEL_OK")
</pallas_src>

<mosaic_0001>
module attributes {stable_mosaic.version = 11 : i64} {
  func.func @node_encoder_kernel(%arg0: memref<16x32xf32, #tpu.memory_space<vmem>>, %arg1: memref<32x32xf32, #tpu.memory_space<vmem>>, %arg2: memref<32x16xbf16, #tpu.memory_space<vmem>>, %arg3: memref<32x16xbf16, #tpu.memory_space<vmem>>, %arg4: memref<16x2xbf16, #tpu.memory_space<vmem>>, %arg5: memref<3x32x64xf32, #tpu.memory_space<vmem>>, %arg6: memref<3x1x64xf32, #tpu.memory_space<vmem>>, %arg7: memref<3x1x64xf32, #tpu.memory_space<vmem>>, %arg8: memref<3x1x64xf32, #tpu.memory_space<vmem>>, %arg9: memref<3x64x32xf32, #tpu.memory_space<vmem>>, %arg10: memref<3x1x32xf32, #tpu.memory_space<vmem>>, %arg11: memref<3x1x32xf32, #tpu.memory_space<vmem>>, %arg12: memref<3x1x32xf32, #tpu.memory_space<vmem>>, %arg13: memref<2x32xf32, #tpu.memory_space<vmem>>, %arg14: memref<16x32xf32, #tpu.memory_space<vmem>>) attributes {dimension_semantics = [], scalar_prefetch = 0 : i64, scratch_operands = 0 : i64, tpu.core_type = #tpu.core_type<tc>} {
    %c0 = arith.constant 0 : index
    %c0_0 = arith.constant 0 : index
    %0 = vector.load %arg0[%c0, %c0_0] : memref<16x32xf32, #tpu.memory_space<vmem>>, vector<16x32xf32>
    %c0_1 = arith.constant 0 : index
    %c0_2 = arith.constant 0 : index
    %1 = vector.load %arg1[%c0_1, %c0_2] : memref<32x32xf32, #tpu.memory_space<vmem>>, vector<32x32xf32>
    %c0_3 = arith.constant 0 : index
    %c0_4 = arith.constant 0 : index
    %2 = vector.load %arg2[%c0_3, %c0_4] : memref<32x16xbf16, #tpu.memory_space<vmem>>, vector<32x16xbf16>
    %3 = arith.extf %2 : vector<32x16xbf16> to vector<32x16xf32>
    %c0_5 = arith.constant 0 : index
    %c0_6 = arith.constant 0 : index
    %4 = vector.load %arg3[%c0_5, %c0_6] : memref<32x16xbf16, #tpu.memory_space<vmem>>, vector<32x16xbf16>
    %5 = arith.extf %4 : vector<32x16xbf16> to vector<32x16xf32>
    %c0_7 = arith.constant 0 : index
    %c0_8 = arith.constant 0 : index
    %6 = vector.load %arg4[%c0_7, %c0_8] : memref<16x2xbf16, #tpu.memory_space<vmem>>, vector<16x2xbf16>
    %7 = arith.extf %6 : vector<16x2xbf16> to vector<16x2xf32>
    %cst = arith.constant dense<0.000000e+00> : vector<32x32xf32>
    %8 = tpu.matmul %3, %0, %cst {dimension_numbers = #tpu.dot_dimension_numbers<[1], [0], [0], [1], [0, 0, 1, 1], [], []>} : vector<32x16xf32>, vector<16x32xf32>, vector<32x32xf32> -> vector<32x32xf32>
    %9 = arith.addf %8, %1 : vector<32x32xf32>
    %cst_9 = arith.constant 0.000000e+00 : f32
    %10 = vector.broadcast %cst_9 : f32 to vector<32x32xf32>
    %11 = arith.maximumf %9, %10 : vector<32x32xf32>
    %cst_10 = arith.constant dense<0.000000e+00> : vector<16x32xf32>
    %12 = tpu.matmul %5, %11, %cst_10 {dimension_numbers = #tpu.dot_dimension_numbers<[0], [0], [1], [1], [0, 1, 1, 1], [], []>} : vector<32x16xf32>, vector<32x32xf32>, vector<16x32xf32> -> vector<16x32xf32>
    %13 = arith.addf %0, %12 : vector<16x32xf32>
    %c0_11 = arith.constant 0 : index
    %c0_12 = arith.constant 0 : index
    %c0_13 = arith.constant 0 : index
    %14 = vector.load %arg5[%c0_11, %c0_12, %c0_13] : memref<3x32x64xf32, #tpu.memory_space<vmem>>, vector<1x32x64xf32>
    %15 = vector.shape_cast %14 : vector<1x32x64xf32> to vector<32x64xf32>
    %cst_14 = arith.constant dense<0.000000e+00> : vector<16x64xf32>
    %16 = tpu.matmul %13, %15, %cst_14 {dimension_numbers = #tpu.dot_dimension_numbers<[1], [0], [0], [1], [0, 0, 1, 1], [], []>} : vector<16x32xf32>, vector<32x64xf32>, vector<16x64xf32> -> vector<16x64xf32>
    %c0_15 = arith.constant 0 : index
    %c0_16 = arith.constant 0 : index
    %c0_17 = arith.constant 0 : index
    %17 = vector.load %arg6[%c0_15, %c0_16, %c0_17] : memref<3x1x64xf32, #tpu.memory_space<vmem>>, vector<1x1x64xf32>
    %18 = vector.shape_cast %17 : vector<1x1x64xf32> to vector<1x64xf32>
    %19 = vector.broadcast %18 : vector<1x64xf32> to vector<16x64xf32>
    %20 = arith.addf %16, %19 : vector<16x64xf32>
    %c0_18 = arith.constant 0 : index
    %c0_19 = arith.constant 0 : index
    %c0_20 = arith.constant 0 : index
    %21 = vector.load %arg7[%c0_18, %c0_19, %c0_20] : memref<3x1x64xf32, #tpu.memory_space<vmem>>, vector<1x1x64xf32>
    %22 = vector.shape_cast %21 : vector<1x1x64xf32> to vector<1x64xf32>
    %c0_21 = arith.constant 0 : index
    %c0_22 = arith.constant 0 : index
    %c0_23 = arith.constant 0 : index
    %23 = vector.load %arg8[%c0_21, %c0_22, %c0_23] : memref<3x1x64xf32, #tpu.memory_space<vmem>>, vector<1x1x64xf32>
    %24 = vector.shape_cast %23 : vector<1x1x64xf32> to vector<1x64xf32>
    %cst_24 = arith.constant dense<0.000000e+00> : vector<64xf32>
    %25 = vector.multi_reduction <add>, %20, %cst_24 [0] : vector<16x64xf32> to vector<64xf32>
    %26 = vector.shape_cast %25 : vector<64xf32> to vector<1x64xf32>
    %27 = arith.mulf %20, %20 : vector<16x64xf32>
    %cst_25 = arith.constant dense<0.000000e+00> : vector<64xf32>
    %28 = vector.multi_reduction <add>, %27, %cst_25 [0] : vector<16x64xf32> to vector<64xf32>
    %29 = vector.shape_cast %28 : vector<64xf32> to vector<1x64xf32>
    %cst_26 = arith.constant 6.250000e-02 : f32
    %30 = vector.broadcast %cst_26 : f32 to vector<1x64xf32>
    %31 = arith.mulf %26, %30 : vector<1x64xf32>
    %cst_27 = arith.constant 6.250000e-02 : f32
    %32 = vector.broadcast %cst_27 : f32 to vector<1x64xf32>
    %33 = arith.mulf %29, %32 : vector<1x64xf32>
    %34 = arith.mulf %31, %31 : vector<1x64xf32>
    %35 = arith.subf %33, %34 : vector<1x64xf32>
    %cst_28 = arith.constant 9.99999974E-6 : f32
    %36 = vector.broadcast %cst_28 : f32 to vector<1x64xf32>
    %37 = arith.addf %35, %36 : vector<1x64xf32>
    %38 = math.rsqrt %37 : vector<1x64xf32>
    %39 = arith.mulf %22, %38 : vector<1x64xf32>
    %40 = arith.mulf %31, %39 : vector<1x64xf32>
    %41 = arith.subf %24, %40 : vector<1x64xf32>
    %42 = vector.broadcast %39 : vector<1x64xf32> to vector<16x64xf32>
    %43 = arith.mulf %20, %42 : vector<16x64xf32>
    %44 = vector.broadcast %41 : vector<1x64xf32> to vector<16x64xf32>
    %45 = arith.addf %43, %44 : vector<16x64xf32>
    %cst_29 = arith.constant 0.000000e+00 : f32
    %46 = vector.broadcast %cst_29 : f32 to vector<16x64xf32>
    %47 = arith.maximumf %45, %46 : vector<16x64xf32>
    %c0_30 = arith.constant 0 : index
    %c0_31 = arith.constant 0 : index
    %c0_32 = arith.constant 0 : index
    %48 = vector.load %arg9[%c0_30, %c0_31, %c0_32] : memref<3x64x32xf32, #tpu.memory_space<vmem>>, vector<1x64x32xf32>
    %49 = vector.shape_cast %48 : vector<1x64x32xf32> to vector<64x32xf32>
    %cst_33 = arith.constant dense<0.000000e+00> : vector<16x32xf32>
    %50 = tpu.matmul %47, %49, %cst_33 {dimension_numbers = #tpu.dot_dimension_numbers<[1], [0], [0], [1], [0, 0, 1, 1], [], []>} : vector<16x64xf32>, vector<64x32xf32>, vector<16x32xf32> -> vector<16x32xf32>
    %c0_34 = arith.constant 0 : index
    %c0_35 = arith.constant 0 : index
    %c0_36 = arith.constant 0 : index
    %51 = vector.load %arg10[%c0_34, %c0_35, %c0_36] : memref<3x1x32xf32, #tpu.memory_space<vmem>>, vector<1x1x32xf32>
    %52 = vector.shape_cast %51 : vector<1x1x32xf32> to vector<1x32xf32>
    %53 = vector.broadcast %52 : vector<1x32xf32> to vector<16x32xf32>
    %54 = arith.addf %50, %53 : vector<16x32xf32>
    %c0_37 = arith.constant 0 : index
    %c0_38 = arith.constant 0 : index
    %c0_39 = arith.constant 0 : index
    %55 = vector.load %arg11[%c0_37, %c0_38, %c0_39] : memref<3x1x32xf32, #tpu.memory_space<vmem>>, vector<1x1x32xf32>
    %56 = vector.shape_cast %55 : vector<1x1x32xf32> to vector<1x32xf32>
    %c0_40 = arith.constant 0 : index
    %c0_41 = arith.constant 0 : index
    %c0_42 = arith.constant 0 : index
    %57 = vector.load %arg12[%c0_40, %c0_41, %c0_42] : memref<3x1x32xf32, #tpu.memory_space<vmem>>, vector<1x1x32xf32>
    %58 = vector.shape_cast %57 : vector<1x1x32xf32> to vector<1x32xf32>
    %cst_43 = arith.constant dense<0.000000e+00> : vector<32xf32>
    %59 = vector.multi_reduction <add>, %54, %cst_43 [0] : vector<16x32xf32> to vector<32xf32>
    %60 = vector.shape_cast %59 : vector<32xf32> to vector<1x32xf32>
    %61 = arith.mulf %54, %54 : vector<16x32xf32>
    %cst_44 = arith.constant dense<0.000000e+00> : vector<32xf32>
    %62 = vector.multi_reduction <add>, %61, %cst_44 [0] : vector<16x32xf32> to vector<32xf32>
    %63 = vector.shape_cast %62 : vector<32xf32> to vector<1x32xf32>
    %cst_45 = arith.constant 6.250000e-02 : f32
    %64 = vector.broadcast %cst_45 : f32 to vector<1x32xf32>
    %65 = arith.mulf %60, %64 : vector<1x32xf32>
    %cst_46 = arith.constant 6.250000e-02 : f32
    %66 = vector.broadcast %cst_46 : f32 to vector<1x32xf32>
    %67 = arith.mulf %63, %66 : vector<1x32xf32>
    %68 = arith.mulf %65, %65 : vector<1x32xf32>
    %69 = arith.subf %67, %68 : vector<1x32xf32>
    %cst_47 = arith.constant 9.99999974E-6 : f32
    %70 = vector.broadcast %cst_47 : f32 to vector<1x32xf32>
    %71 = arith.addf %69, %70 : vector<1x32xf32>
    %72 = math.rsqrt %71 : vector<1x32xf32>
    %73 = arith.mulf %56, %72 : vector<1x32xf32>
    %74 = arith.mulf %65, %73 : vector<1x32xf32>
    %75 = arith.subf %58, %74 : vector<1x32xf32>
    %76 = vector.broadcast %73 : vector<1x32xf32> to vector<16x32xf32>
    %77 = arith.mulf %54, %76 : vector<16x32xf32>
    %78 = vector.broadcast %75 : vector<1x32xf32> to vector<16x32xf32>
    %79 = arith.addf %77, %78 : vector<16x32xf32>
    %cst_48 = arith.constant 0.000000e+00 : f32
    %80 = vector.broadcast %cst_48 : f32 to vector<16x32xf32>
    %81 = arith.maximumf %79, %80 : vector<16x32xf32>
    %cst_49 = arith.constant dense<0.000000e+00> : vector<32x32xf32>
    %82 = tpu.matmul %3, %81, %cst_49 {dimension_numbers = #tpu.dot_dimension_numbers<[1], [0], [0], [1], [0, 0, 1, 1], [], []>} : vector<32x16xf32>, vector<16x32xf32>, vector<32x32xf32> -> vector<32x32xf32>
    %83 = arith.addf %82, %1 : vector<32x32xf32>
    %cst_50 = arith.constant 0.000000e+00 : f32
    %84 = vector.broadcast %cst_50 : f32 to vector<32x32xf32>
    %85 = arith.maximumf %83, %84 : vector<32x32xf32>
    %cst_51 = arith.constant dense<0.000000e+00> : vector<16x32xf32>
    %86 = tpu.matmul %5, %85, %cst_51 {dimension_numbers = #tpu.dot_dimension_numbers<[0], [0], [1], [1], [0, 1, 1, 1], [], []>} : vector<32x16xf32>, vector<32x32xf32>, vector<16x32xf32> -> vector<16x32xf32>
    %87 = arith.addf %81, %86 : vector<16x32xf32>
    %c1 = arith.constant 1 : index
    %c0_52 = arith.constant 0 : index
    %c0_53 = arith.constant 0 : index
    %88 = vector.load %arg5[%c1, %c0_52, %c0_53] : memref<3x32x64xf32, #tpu.memory_space<vmem>>, vector<1x32x64xf32>
    %89 = vector.shape_cast %88 : vector<1x32x64xf32> to vector<32x64xf32>
    %cst_54 = arith.constant dense<0.000000e+00> : vector<16x64xf32>
    %90 = tpu.matmul %87, %89, %cst_54 {dimension_numbers = #tpu.dot_dimension_numbers<[1], [0], [0], [1], [0, 0, 1, 1], [], []>} : vector<16x32xf32>, vector<32x64xf32>, vector<16x64xf32> -> vector<16x64xf32>
    %c1_55 = arith.constant 1 : index
    %c0_56 = arith.constant 0 : index
    %c0_57 = arith.constant 0 : index
    %91 = vector.load %arg6[%c1_55, %c0_56, %c0_57] : memref<3x1x64xf32, #tpu.memory_space<vmem>>, vector<1x1x64xf32>
    %92 = vector.shape_cast %91 : vector<1x1x64xf32> to vector<1x64xf32>
    %93 = vector.broadcast %92 : vector<1x64xf32> to vector<16x64xf32>
    %94 = arith.addf %90, %93 : vector<16x64xf32>
    %c1_58 = arith.constant 1 : index
    %c0_59 = arith.constant 0 : index
    %c0_60 = arith.constant 0 : index
    %95 = vector.load %arg7[%c1_58, %c0_59, %c0_60] : memref<3x1x64xf32, #tpu.memory_space<vmem>>, vector<1x1x64xf32>
    %96 = vector.shape_cast %95 : vector<1x1x64xf32> to vector<1x64xf32>
    %c1_61 = arith.constant 1 : index
    %c0_62 = arith.constant 0 : index
    %c0_63 = arith.constant 0 : index
    %97 = vector.load %arg8[%c1_61, %c0_62, %c0_63] : memref<3x1x64xf32, #tpu.memory_space<vmem>>, vector<1x1x64xf32>
    %98 = vector.shape_cast %97 : vector<1x1x64xf32> to vector<1x64xf32>
    %cst_64 = arith.constant dense<0.000000e+00> : vector<64xf32>
    %99 = vector.multi_reduction <add>, %94, %cst_64 [0] : vector<16x64xf32> to vector<64xf32>
    %100 = vector.shape_cast %99 : vector<64xf32> to vector<1x64xf32>
    %101 = arith.mulf %94, %94 : vector<16x64xf32>
    %cst_65 = arith.constant dense<0.000000e+00> : vector<64xf32>
    %102 = vector.multi_reduction <add>, %101, %cst_65 [0] : vector<16x64xf32> to vector<64xf32>
    %103 = vector.shape_cast %102 : vector<64xf32> to vector<1x64xf32>
    %cst_66 = arith.constant 6.250000e-02 : f32
    %104 = vector.broadcast %cst_66 : f32 to vector<1x64xf32>
    %105 = arith.mulf %100, %104 : vector<1x64xf32>
    %cst_67 = arith.constant 6.250000e-02 : f32
    %106 = vector.broadcast %cst_67 : f32 to vector<1x64xf32>
    %107 = arith.mulf %103, %106 : vector<1x64xf32>
    %108 = arith.mulf %105, %105 : vector<1x64xf32>
    %109 = arith.subf %107, %108 : vector<1x64xf32>
    %cst_68 = arith.constant 9.99999974E-6 : f32
    %110 = vector.broadcast %cst_68 : f32 to vector<1x64xf32>
    %111 = arith.addf %109, %110 : vector<1x64xf32>
    %112 = math.rsqrt %111 : vector<1x64xf32>
    %113 = arith.mulf %96, %112 : vector<1x64xf32>
    %114 = arith.mulf %105, %113 : vector<1x64xf32>
    %115 = arith.subf %98, %114 : vector<1x64xf32>
    %116 = vector.broadcast %113 : vector<1x64xf32> to vector<16x64xf32>
    %117 = arith.mulf %94, %116 : vector<16x64xf32>
    %118 = vector.broadcast %115 : vector<1x64xf32> to vector<16x64xf32>
    %119 = arith.addf %117, %118 : vector<16x64xf32>
    %cst_69 = arith.constant 0.000000e+00 : f32
    %120 = vector.broadcast %cst_69 : f32 to vector<16x64xf32>
    %121 = arith.maximumf %119, %120 : vector<16x64xf32>
    %c1_70 = arith.constant 1 : index
    %c0_71 = arith.constant 0 : index
    %c0_72 = arith.constant 0 : index
    %122 = vector.load %arg9[%c1_70, %c0_71, %c0_72] : memref<3x64x32xf32, #tpu.memory_space<vmem>>, vector<1x64x32xf32>
    %123 = vector.shape_cast %122 : vector<1x64x32xf32> to vector<64x32xf32>
    %cst_73 = arith.constant dense<0.000000e+00> : vector<16x32xf32>
    %124 = tpu.matmul %121, %123, %cst_73 {dimension_numbers = #tpu.dot_dimension_numbers<[1], [0], [0], [1], [0, 0, 1, 1], [], []>} : vector<16x64xf32>, vector<64x32xf32>, vector<16x32xf32> -> vector<16x32xf32>
    %c1_74 = arith.constant 1 : index
    %c0_75 = arith.constant 0 : index
    %c0_76 = arith.constant 0 : index
    %125 = vector.load %arg10[%c1_74, %c0_75, %c0_76] : memref<3x1x32xf32, #tpu.memory_space<vmem>>, vector<1x1x32xf32>
    %126 = vector.shape_cast %125 : vector<1x1x32xf32> to vector<1x32xf32>
    %127 = vector.broadcast %126 : vector<1x32xf32> to vector<16x32xf32>
    %128 = arith.addf %124, %127 : vector<16x32xf32>
    %c1_77 = arith.constant 1 : index
    %c0_78 = arith.constant 0 : index
    %c0_79 = arith.constant 0 : index
    %129 = vector.load %arg11[%c1_77, %c0_78, %c0_79] : memref<3x1x32xf32, #tpu.memory_space<vmem>>, vector<1x1x32xf32>
    %130 = vector.shape_cast %129 : vector<1x1x32xf32> to vector<1x32xf32>
    %c1_80 = arith.constant 1 : index
    %c0_81 = arith.constant 0 : index
    %c0_82 = arith.constant 0 : index
    %131 = vector.load %arg12[%c1_80, %c0_81, %c0_82] : memref<3x1x32xf32, #tpu.memory_space<vmem>>, vector<1x1x32xf32>
    %132 = vector.shape_cast %131 : vector<1x1x32xf32> to vector<1x32xf32>
    %cst_83 = arith.constant dense<0.000000e+00> : vector<32xf32>
    %133 = vector.multi_reduction <add>, %128, %cst_83 [0] : vector<16x32xf32> to vector<32xf32>
    %134 = vector.shape_cast %133 : vector<32xf32> to vector<1x32xf32>
    %135 = arith.mulf %128, %128 : vector<16x32xf32>
    %cst_84 = arith.constant dense<0.000000e+00> : vector<32xf32>
    %136 = vector.multi_reduction <add>, %135, %cst_84 [0] : vector<16x32xf32> to vector<32xf32>
    %137 = vector.shape_cast %136 : vector<32xf32> to vector<1x32xf32>
    %cst_85 = arith.constant 6.250000e-02 : f32
    %138 = vector.broadcast %cst_85 : f32 to vector<1x32xf32>
    %139 = arith.mulf %134, %138 : vector<1x32xf32>
    %cst_86 = arith.constant 6.250000e-02 : f32
    %140 = vector.broadcast %cst_86 : f32 to vector<1x32xf32>
    %141 = arith.mulf %137, %140 : vector<1x32xf32>
    %142 = arith.mulf %139, %139 : vector<1x32xf32>
    %143 = arith.subf %141, %142 : vector<1x32xf32>
    %cst_87 = arith.constant 9.99999974E-6 : f32
    %144 = vector.broadcast %cst_87 : f32 to vector<1x32xf32>
    %145 = arith.addf %143, %144 : vector<1x32xf32>
    %146 = math.rsqrt %145 : vector<1x32xf32>
    %147 = arith.mulf %130, %146 : vector<1x32xf32>
    %148 = arith.mulf %139, %147 : vector<1x32xf32>
    %149 = arith.subf %132, %148 : vector<1x32xf32>
    %150 = vector.broadcast %147 : vector<1x32xf32> to vector<16x32xf32>
    %151 = arith.mulf %128, %150 : vector<16x32xf32>
    %152 = vector.broadcast %149 : vector<1x32xf32> to vector<16x32xf32>
    %153 = arith.addf %151, %152 : vector<16x32xf32>
    %cst_88 = arith.constant 0.000000e+00 : f32
    %154 = vector.broadcast %cst_88 : f32 to vector<16x32xf32>
    %155 = arith.maximumf %153, %154 : vector<16x32xf32>
    %cst_89 = arith.constant dense<0.000000e+00> : vector<32x32xf32>
    %156 = tpu.matmul %3, %155, %cst_89 {dimension_numbers = #tpu.dot_dimension_numbers<[1], [0], [0], [1], [0, 0, 1, 1], [], []>} : vector<32x16xf32>, vector<16x32xf32>, vector<32x32xf32> -> vector<32x32xf32>
    %157 = arith.addf %156, %1 : vector<32x32xf32>
    %cst_90 = arith.constant 0.000000e+00 : f32
    %158 = vector.broadcast %cst_90 : f32 to vector<32x32xf32>
    %159 = arith.maximumf %157, %158 : vector<32x32xf32>
    %cst_91 = arith.constant dense<0.000000e+00> : vector<16x32xf32>
    %160 = tpu.matmul %5, %159, %cst_91 {dimension_numbers = #tpu.dot_dimension_numbers<[0], [0], [1], [1], [0, 1, 1, 1], [], []>} : vector<32x16xf32>, vector<32x32xf32>, vector<16x32xf32> -> vector<16x32xf32>
    %161 = arith.addf %155, %160 : vector<16x32xf32>
    %c2 = arith.constant 2 : index
    %c0_92 = arith.constant 0 : index
    %c0_93 = arith.constant 0 : index
    %162 = vector.load %arg5[%c2, %c0_92, %c0_93] : memref<3x32x64xf32, #tpu.memory_space<vmem>>, vector<1x32x64xf32>
    %163 = vector.shape_cast %162 : vector<1x32x64xf32> to vector<32x64xf32>
    %cst_94 = arith.constant dense<0.000000e+00> : vector<16x64xf32>
    %164 = tpu.matmul %161, %163, %cst_94 {dimension_numbers = #tpu.dot_dimension_numbers<[1], [0], [0], [1], [0, 0, 1, 1], [], []>} : vector<16x32xf32>, vector<32x64xf32>, vector<16x64xf32> -> vector<16x64xf32>
    %c2_95 = arith.constant 2 : index
    %c0_96 = arith.constant 0 : index
    %c0_97 = arith.constant 0 : index
    %165 = vector.load %arg6[%c2_95, %c0_96, %c0_97] : memref<3x1x64xf32, #tpu.memory_space<vmem>>, vector<1x1x64xf32>
    %166 = vector.shape_cast %165 : vector<1x1x64xf32> to vector<1x64xf32>
    %167 = vector.broadcast %166 : vector<1x64xf32> to vector<16x64xf32>
    %168 = arith.addf %164, %167 : vector<16x64xf32>
    %c2_98 = arith.constant 2 : index
    %c0_99 = arith.constant 0 : index
    %c0_100 = arith.constant 0 : index
    %169 = vector.load %arg7[%c2_98, %c0_99, %c0_100] : memref<3x1x64xf32, #tpu.memory_space<vmem>>, vector<1x1x64xf32>
    %170 = vector.shape_cast %169 : vector<1x1x64xf32> to vector<1x64xf32>
    %c2_101 = arith.constant 2 : index
    %c0_102 = arith.constant 0 : index
    %c0_103 = arith.constant 0 : index
    %171 = vector.load %arg8[%c2_101, %c0_102, %c0_103] : memref<3x1x64xf32, #tpu.memory_space<vmem>>, vector<1x1x64xf32>
    %172 = vector.shape_cast %171 : vector<1x1x64xf32> to vector<1x64xf32>
    %cst_104 = arith.constant dense<0.000000e+00> : vector<64xf32>
    %173 = vector.multi_reduction <add>, %168, %cst_104 [0] : vector<16x64xf32> to vector<64xf32>
    %174 = vector.shape_cast %173 : vector<64xf32> to vector<1x64xf32>
    %175 = arith.mulf %168, %168 : vector<16x64xf32>
    %cst_105 = arith.constant dense<0.000000e+00> : vector<64xf32>
    %176 = vector.multi_reduction <add>, %175, %cst_105 [0] : vector<16x64xf32> to vector<64xf32>
    %177 = vector.shape_cast %176 : vector<64xf32> to vector<1x64xf32>
    %cst_106 = arith.constant 6.250000e-02 : f32
    %178 = vector.broadcast %cst_106 : f32 to vector<1x64xf32>
    %179 = arith.mulf %174, %178 : vector<1x64xf32>
    %cst_107 = arith.constant 6.250000e-02 : f32
    %180 = vector.broadcast %cst_107 : f32 to vector<1x64xf32>
    %181 = arith.mulf %177, %180 : vector<1x64xf32>
    %182 = arith.mulf %179, %179 : vector<1x64xf32>
    %183 = arith.subf %181, %182 : vector<1x64xf32>
    %cst_108 = arith.constant 9.99999974E-6 : f32
    %184 = vector.broadcast %cst_108 : f32 to vector<1x64xf32>
    %185 = arith.addf %183, %184 : vector<1x64xf32>
    %186 = math.rsqrt %185 : vector<1x64xf32>
    %187 = arith.mulf %170, %186 : vector<1x64xf32>
    %188 = arith.mulf %179, %187 : vector<1x64xf32>
    %189 = arith.subf %172, %188 : vector<1x64xf32>
    %190 = vector.broadcast %187 : vector<1x64xf32> to vector<16x64xf32>
    %191 = arith.mulf %168, %190 : vector<16x64xf32>
    %192 = vector.broadcast %189 : vector<1x64xf32> to vector<16x64xf32>
    %193 = arith.addf %191, %192 : vector<16x64xf32>
    %cst_109 = arith.constant 0.000000e+00 : f32
    %194 = vector.broadcast %cst_109 : f32 to vector<16x64xf32>
    %195 = arith.maximumf %193, %194 : vector<16x64xf32>
    %c2_110 = arith.constant 2 : index
    %c0_111 = arith.constant 0 : index
    %c0_112 = arith.constant 0 : index
    %196 = vector.load %arg9[%c2_110, %c0_111, %c0_112] : memref<3x64x32xf32, #tpu.memory_space<vmem>>, vector<1x64x32xf32>
    %197 = vector.shape_cast %196 : vector<1x64x32xf32> to vector<64x32xf32>
    %cst_113 = arith.constant dense<0.000000e+00> : vector<16x32xf32>
    %198 = tpu.matmul %195, %197, %cst_113 {dimension_numbers = #tpu.dot_dimension_numbers<[1], [0], [0], [1], [0, 0, 1, 1], [], []>} : vector<16x64xf32>, vector<64x32xf32>, vector<16x32xf32> -> vector<16x32xf32>
    %c2_114 = arith.constant 2 : index
    %c0_115 = arith.constant 0 : index
    %c0_116 = arith.constant 0 : index
    %199 = vector.load %arg10[%c2_114, %c0_115, %c0_116] : memref<3x1x32xf32, #tpu.memory_space<vmem>>, vector<1x1x32xf32>
    %200 = vector.shape_cast %199 : vector<1x1x32xf32> to vector<1x32xf32>
    %201 = vector.broadcast %200 : vector<1x32xf32> to vector<16x32xf32>
    %202 = arith.addf %198, %201 : vector<16x32xf32>
    %c2_117 = arith.constant 2 : index
    %c0_118 = arith.constant 0 : index
    %c0_119 = arith.constant 0 : index
    %203 = vector.load %arg11[%c2_117, %c0_118, %c0_119] : memref<3x1x32xf32, #tpu.memory_space<vmem>>, vector<1x1x32xf32>
    %204 = vector.shape_cast %203 : vector<1x1x32xf32> to vector<1x32xf32>
    %c2_120 = arith.constant 2 : index
    %c0_121 = arith.constant 0 : index
    %c0_122 = arith.constant 0 : index
    %205 = vector.load %arg12[%c2_120, %c0_121, %c0_122] : memref<3x1x32xf32, #tpu.memory_space<vmem>>, vector<1x1x32xf32>
    %206 = vector.shape_cast %205 : vector<1x1x32xf32> to vector<1x32xf32>
    %cst_123 = arith.constant dense<0.000000e+00> : vector<32xf32>
    %207 = vector.multi_reduction <add>, %202, %cst_123 [0] : vector<16x32xf32> to vector<32xf32>
    %208 = vector.shape_cast %207 : vector<32xf32> to vector<1x32xf32>
    %209 = arith.mulf %202, %202 : vector<16x32xf32>
    %cst_124 = arith.constant dense<0.000000e+00> : vector<32xf32>
    %210 = vector.multi_reduction <add>, %209, %cst_124 [0] : vector<16x32xf32> to vector<32xf32>
    %211 = vector.shape_cast %210 : vector<32xf32> to vector<1x32xf32>
    %cst_125 = arith.constant 6.250000e-02 : f32
    %212 = vector.broadcast %cst_125 : f32 to vector<1x32xf32>
    %213 = arith.mulf %208, %212 : vector<1x32xf32>
    %cst_126 = arith.constant 6.250000e-02 : f32
    %214 = vector.broadcast %cst_126 : f32 to vector<1x32xf32>
    %215 = arith.mulf %211, %214 : vector<1x32xf32>
    %216 = arith.mulf %213, %213 : vector<1x32xf32>
    %217 = arith.subf %215, %216 : vector<1x32xf32>
    %cst_127 = arith.constant 9.99999974E-6 : f32
    %218 = vector.broadcast %cst_127 : f32 to vector<1x32xf32>
    %219 = arith.addf %217, %218 : vector<1x32xf32>
    %220 = math.rsqrt %219 : vector<1x32xf32>
    %221 = arith.mulf %204, %220 : vector<1x32xf32>
    %222 = arith.mulf %213, %221 : vector<1x32xf32>
    %223 = arith.subf %206, %222 : vector<1x32xf32>
    %224 = vector.broadcast %221 : vector<1x32xf32> to vector<16x32xf32>
    %225 = arith.mulf %202, %224 : vector<16x32xf32>
    %226 = vector.broadcast %223 : vector<1x32xf32> to vector<16x32xf32>
    %227 = arith.addf %225, %226 : vector<16x32xf32>
    %c0_128 = arith.constant 0 : index
    %c0_129 = arith.constant 0 : index
    %228 = vector.load %arg14[%c0_128, %c0_129] : memref<16x32xf32, #tpu.memory_space<vmem>>, vector<16x32xf32>
    tpu.vector_store %arg14[%c0_128, %c0_129], %227 {strides = array<i32>} : memref<16x32xf32, #tpu.memory_space<vmem>>, vector<16x32xf32>,
    %cst_130 = arith.constant dense<0.000000e+00> : vector<2x32xf32>
    %229 = tpu.matmul %7, %227, %cst_130 {dimension_numbers = #tpu.dot_dimension_numbers<[0], [0], [1], [1], [0, 1, 1, 1], [], []>} : vector<16x2xf32>, vector<16x32xf32>, vector<2x32xf32> -> vector<2x32xf32>
    %c0_131 = arith.constant 0 : index
    %c0_132 = arith.constant 0 : index
    %230 = vector.load %arg13[%c0_131, %c0_132] : memref<2x32xf32, #tpu.memory_space<vmem>>, vector<2x32xf32>
    tpu.vector_store %arg13[%c0_131, %c0_132], %229 {strides = array<i32>} : memref<2x32xf32, #tpu.memory_space<vmem>>, vector<2x32xf32>,
    return
  }
}

</mosaic_0001>

<llo_original>
// kernel: tpu_custom_call.1
$region0: #{tpu_custom_call.1}
  #allocation0 [shape = 'u32[]', space=smem, size = 0x4, offset = 0x4, fixed_abs, tag = 'smem constant byte address 0x4 - core index']
  #allocation1 [shape = 'u32[72,128]{1,0:T(1,128)}', space=vmem, size = 0x9000, scoped, tag = 'internal scratch']
  %s0 = inlined_call_operand.vmem [shape: f32[16,32], index: 0, kind: input, shape index: {}]
  %s1 = inlined_call_operand.vmem [shape: f32[32,32], index: 1, kind: input, shape index: {}]
  %s2 = inlined_call_operand.vmem [shape: bf16[32,16], index: 2, kind: input, shape index: {}]
  %s3 = inlined_call_operand.vmem [shape: bf16[32,16], index: 3, kind: input, shape index: {}]
  %s4 = inlined_call_operand.vmem [shape: bf16[16,2], index: 4, kind: input, shape index: {}]
  %s5 = inlined_call_operand.vmem [shape: f32[3,32,64], index: 5, kind: input, shape index: {}]
  %s6 = inlined_call_operand.vmem [shape: f32[3,1,64], index: 6, kind: input, shape index: {}]
  %s7 = inlined_call_operand.vmem [shape: f32[3,1,64], index: 7, kind: input, shape index: {}]
  %s8 = inlined_call_operand.vmem [shape: f32[3,1,64], index: 8, kind: input, shape index: {}]
  %s9 = inlined_call_operand.vmem [shape: f32[3,64,32], index: 9, kind: input, shape index: {}]
  %s10 = inlined_call_operand.vmem [shape: f32[3,1,32], index: 10, kind: input, shape index: {}]
  %s11 = inlined_call_operand.vmem [shape: f32[3,1,32], index: 11, kind: input, shape index: {}]
  %s12 = inlined_call_operand.vmem [shape: f32[3,1,32], index: 12, kind: input, shape index: {}]
  %s13 = inlined_call_operand.hbm [shape: f32[2,32], index: 13, kind: output, shape index: {0}]
  %s14 = inlined_call_operand.hbm [shape: f32[16,32], index: 14, kind: output, shape index: {1}]
  %15 = xla_tuple %s13, %s14
  %s16 = sld [smem:[#allocation0]]
  $region70: #{tpu_custom_call.1} parent=0
    _
  %s18 = ssub.s32 1, %s16
  %s19 = scalar_select 0, %s18, %s16
  $region1: #{tpu_custom_call.1} parent=0
    #allocation2 [shape = 'u8[1024]{0}', space=vmem, size = 0x400, scoped, tag = 'output window, operand 0, single buffered']
    #allocation3 [shape = 's32[1]{0}', space=sflag, size = 0x4, scoped, tag = 'scoped memory for tpu_custom_call.1']
    #allocation4 [shape = 'u8[8192]{0}', space=vmem, size = 0x2000, scoped, tag = 'output window, operand 1, single buffered']
    #allocation5 [shape = 's32[1]{0}', space=sflag, size = 0x4, scoped, tag = 'scoped memory for tpu_custom_call.1']
    %20 = vsyncpa [#allocation3], 0
    %21 = vsyncpa [#allocation5], 0
    // Predicated region
    $region2: #{tpu_custom_call.1} parent=1 // pred_check
      _
    $region3: #{tpu_custom_call.1} parent=1 // pred_check_branch
      %23 = sbr.rel (0) target = $region5
    $region4: #{tpu_custom_call.1} parent=1 // pred_region
      _
    $region5: #{tpu_custom_call.1} parent=1 // pred_fallthru
      _
    // Predicated region
    $region6: #{tpu_custom_call.1} parent=1 // pred_check
      _
    $region7: #{tpu_custom_call.1} parent=1 // pred_check_branch
      %25 = sbr.rel (0) target = $region9
    $region8: #{tpu_custom_call.1} parent=1 // pred_region
      _
    $region9: #{tpu_custom_call.1} parent=1 // pred_fallthru
      _
    // Predicated region
    $region10: #{tpu_custom_call.1} parent=1 // pred_check
      _
    $region11: #{tpu_custom_call.1} parent=1 // pred_check_branch
      %27 = sbr.rel (0) target = $region13
    $region12: #{tpu_custom_call.1} parent=1 // pred_region
      _
    $region13: #{tpu_custom_call.1} parent=1 // pred_fallthru
      _
    // Predicated region
    $region14: #{tpu_custom_call.1} parent=1 // pred_check
      _
    $region15: #{tpu_custom_call.1} parent=1 // pred_check_branch
      %29 = sbr.rel (0) target = $region17
    $region16: #{tpu_custom_call.1} parent=1 // pred_region
      _
    $region17: #{tpu_custom_call.1} parent=1 // pred_fallthru
      _
    // Predicated region
    $region18: #{tpu_custom_call.1} parent=1 // pred_check
      _
    $region19: #{tpu_custom_call.1} parent=1 // pred_check_branch
      %31 = sbr.rel (0) target = $region21
    $region20: #{tpu_custom_call.1} parent=1 // pred_region
      _
    $region21: #{tpu_custom_call.1} parent=1 // pred_fallthru
      _
    // Predicated region
    $region22: #{tpu_custom_call.1} parent=1 // pred_check
      _
    $region23: #{tpu_custom_call.1} parent=1 // pred_check_branch
      %33 = sbr.rel (0) target = $region25
    $region24: #{tpu_custom_call.1} parent=1 // pred_region
      _
    $region25: #{tpu_custom_call.1} parent=1 // pred_fallthru
      _
    // Predicated region
    $region26: #{tpu_custom_call.1} parent=1 // pred_check
      _
    $region27: #{tpu_custom_call.1} parent=1 // pred_check_branch
      %35 = sbr.rel (0) target = $region29
    $region28: #{tpu_custom_call.1} parent=1 // pred_region
      _
    $region29: #{tpu_custom_call.1} parent=1 // pred_fallthru
      _
    // Predicated region
    $region30: #{tpu_custom_call.1} parent=1 // pred_check
      _
    $region31: #{tpu_custom_call.1} parent=1 // pred_check_branch
      %37 = sbr.rel (0) target = $region33
    $region32: #{tpu_custom_call.1} parent=1 // pred_region
      _
    $region33: #{tpu_custom_call.1} parent=1 // pred_fallthru
      _
    // Predicated region
    $region34: #{tpu_custom_call.1} parent=1 // pred_check
      _
    $region35: #{tpu_custom_call.1} parent=1 // pred_check_branch
      %39 = sbr.rel (0) target = $region37
    $region36: #{tpu_custom_call.1} parent=1 // pred_region
      _
    $region37: #{tpu_custom_call.1} parent=1 // pred_fallthru
      _
    // Predicated region
    $region38: #{tpu_custom_call.1} parent=1 // pred_check
      _
    $region39: #{tpu_custom_call.1} parent=1 // pred_check_branch
      %41 = sbr.rel (0) target = $region41
    $region40: #{tpu_custom_call.1} parent=1 // pred_region
      _
    $region41: #{tpu_custom_call.1} parent=1 // pred_fallthru
      _
    // Predicated region
    $region42: #{tpu_custom_call.1} parent=1 // pred_check
      _
    $region43: #{tpu_custom_call.1} parent=1 // pred_check_branch
      %43 = sbr.rel (0) target = $region45
    $region44: #{tpu_custom_call.1} parent=1 // pred_region
      _
    $region45: #{tpu_custom_call.1} parent=1 // pred_fallthru
      _
    // Predicated region
    $region46: #{tpu_custom_call.1} parent=1 // pred_check
      _
    $region47: #{tpu_custom_call.1} parent=1 // pred_check_branch
      %45 = sbr.rel (0) target = $region49
    $region48: #{tpu_custom_call.1} parent=1 // pred_region
      _
    $region49: #{tpu_custom_call.1} parent=1 // pred_fallthru
      _
    // Predicated region
    $region50: #{tpu_custom_call.1} parent=1 // pred_check
      _
    $region51: #{tpu_custom_call.1} parent=1 // pred_check_branch
      %47 = sbr.rel (0) target = $region53
    $region52: #{tpu_custom_call.1} parent=1 // pred_region
      _
    $region53: #{tpu_custom_call.1} parent=1 // pred_fallthru
      _
    %v48 = vld [vmem:[%s0] sm:$0xff]
    %v49 = vld [vmem:[%s0 + $0x8] sm:$0xff]
    %v50 = vld [vmem:[%s1] sm:$0xff]
    %v51 = vld [vmem:[%s1 + $0x8] sm:$0xff]
    %v52 = vld [vmem:[%s1 + $0x10] sm:$0xff]
    %v53 = vld [vmem:[%s1 + $0x18] sm:$0xff]
    %v54 = vld [vmem:[%s2] sm:$0xf]
    %v55 = vld [vmem:[%s2 + $0x4] sm:$0xf]
    %v56 = vld [vmem:[%s2 + $0x8] sm:$0xf]
    %v57 = vld [vmem:[%s2 + $0xc] sm:$0xf]
    %v58 = vunpack.c.l.bf16 %v54
    %v59 = vunpack.c.l.bf16 %v55
    %v60 = vunpack.c.l.bf16 %v56
    %v61 = vunpack.c.l.bf16 %v57
    %v62 = vld [vmem:[%s3] sm:$0xf]
    %v63 = vld [vmem:[%s3 + $0x4] sm:$0xf]
    %v64 = vld [vmem:[%s3 + $0x8] sm:$0xf]
    %v65 = vld [vmem:[%s3 + $0xc] sm:$0xf]
    %v66 = vunpack.c.l.bf16 %v62
    %v67 = vunpack.c.l.bf16 %v63
    %v68 = vunpack.c.l.bf16 %v64
    %v69 = vunpack.c.l.bf16 %v65
    %v70 = vld [vmem:[%s4] sm:$0xf]
    %v71 = vld [vmem:[%s4 + $0x4] sm:$0xf]
    %v72 = vunpack.c.l.bf16 %v70
    %v73 = vunpack.c.l.bf16 %v71
    %vm74 = vcmask 130048
    %v76 = vsel %vm74, %v58, 0
    %v79 = vsel %vm74, %v59, 0
    %v82 = vsel %vm74, %v60, 0
    %v85 = vsel %vm74, %v61, 0
    %87 = vmatpush.msra.mxu0 0.0
    %88 = vmatpush.msra.mxu0 0.0
    %89 = vmatpush.msra.mxu0 0.0
    %90 = vmatpush.msra.mxu0 0.0
    %91 = vmatpush.msra.mxu0 0.0
    %92 = vmatpush.msra.mxu0 0.0
    %93 = vmatpush.msra.mxu0 0.0
    %94 = vmatpush.msra.mxu0 0.0
    %95 = vmatpush.msra.mxu0 0.0
    %96 = vmatpush.msra.mxu0 0.0
    %97 = vmatpush.msra.mxu0 0.0
    %98 = vmatpush.msra.mxu0 0.0
    %99 = vmatpush.msra.mxu0 0.0
    %100 = vmatpush.msra.mxu0 0.0
    %101 = vmatpush.msra.mxu0 %v49
    %102 = vmatpush.msra.mxu0 %v48
    %103 = vmatmul.f32.gmra.mxu0 %v76
    %v104 = vpop.f32.mrf.mxu0
    %v105 = vadd.f32 %v50, %v104
    %106 = vmatmul.f32.gmra.mxu0 %v79
    %v107 = vpop.f32.mrf.mxu0
    %v108 = vadd.f32 %v51, %v107
    %109 = vmatmul.f32.gmra.mxu0 %v82
    %v110 = vpop.f32.mrf.mxu0
    %v111 = vadd.f32 %v52, %v110
    %112 = vmatmul.f32.gmra.mxu0 %v85
    %v113 = vpop.f32.mrf.mxu0
    %v114 = vadd.f32 %v53, %v113
    %115 = vdwg.mxu0
    %v116 = vmax.f32 %v105, 0.0
    %v117 = vmax.f32 %v108, 0.0
    %v118 = vmax.f32 %v111, 0.0
    %v119 = vmax.f32 %v114, 0.0
    %120 = vxpose.xlu0.b32.start [1/16] %v66, 128
    %121 = vxpose.xlu0.b32.cont [2/16] %v67, 128
    %122 = vxpose.xlu0.b32.cont [3/16] %v68, 128
    %123 = vxpose.xlu0.b32.cont [4/16] %v69, 128
    %124 = vxpose.xlu0.b32.cont [5/16] 0.0, 128
    %125 = vxpose.xlu0.b32.cont [6/16] 0.0, 128
    %126 = vxpose.xlu0.b32.cont [7/16] 0.0, 128
    %127 = vxpose.xlu0.b32.cont [8/16] 0.0, 128
    %128 = vxpose.xlu0.b32.cont [9/16] 0.0, 128
    %129 = vxpose.xlu0.b32.cont [10/16] 0.0, 128
    %130 = vxpose.xlu0.b32.cont [11/16] 0.0, 128
    %131 = vxpose.xlu0.b32.cont [12/16] 0.0, 128
    %132 = vxpose.xlu0.b32.cont [13/16] 0.0, 128
    %133 = vxpose.xlu0.b32.cont [14/16] 0.0, 128
    %134 = vxpose.xlu0.b32.cont [15/16] 0.0, 128
    %135 = vxpose.xlu0.b32.end [16/16] 0.0, 128
    %v136 = vpop.trf.xlu0
    %v137 = vpop.trf.xlu0
    %v138 = vpop.trf.xlu0
    %v139 = vpop.trf.xlu0
    %v140 = vpop.trf.xlu0
    %v141 = vpop.trf.xlu0
    %v142 = vpop.trf.xlu0
    %v143 = vpop.trf.xlu0
    %v144 = vpop.trf.xlu0
    %v145 = vpop.trf.xlu0
    %v146 = vpop.trf.xlu0
    %v147 = vpop.trf.xlu0
    %v148 = vpop.trf.xlu0
    %v149 = vpop.trf.xlu0
    %v150 = vpop.trf.xlu0
    %v151 = vpop.trf.xlu0
    %vm152 = vcmask 261120
    %v154 = vsel %vm152, %v136, 0
    %v157 = vsel %vm152, %v137, 0
    %159 = vmatpush.msra.mxu0 0.0
    %160 = vmatpush.msra.mxu0 0.0
    %161 = vmatpush.msra.mxu0 0.0
    %162 = vmatpush.msra.mxu0 0.0
    %163 = vmatpush.msra.mxu0 0.0
    %164 = vmatpush.msra.mxu0 0.0
    %165 = vmatpush.msra.mxu0 0.0
    %166 = vmatpush.msra.mxu0 0.0
    %167 = vmatpush.msra.mxu0 0.0
    %168 = vmatpush.msra.mxu0 0.0
    %169 = vmatpush.msra.mxu0 0.0
    %170 = vmatpush.msra.mxu0 0.0
    %171 = vmatpush.msra.mxu0 %v119
    %172 = vmatpush.msra.mxu0 %v118
    %173 = vmatpush.msra.mxu0 %v117
    %174 = vmatpush.msra.mxu0 %v116
    %175 = vmatmul.f32.gmra.mxu0 %v154
    %v176 = vpop.f32.mrf.mxu0
    %v177 = vadd.f32 0.0, %v176
    %178 = vmatmul.f32.gmra.mxu0 %v157
    %v179 = vpop.f32.mrf.mxu0
    %v180 = vadd.f32 0.0, %v179
    %181 = vdwg.mxu0
    %v182 = vadd.f32 %v48, %v177
    %v183 = vadd.f32 %v49, %v180
    %v184 = vld [vmem:[%s5] sm:$0xff]
    %v185 = vld [vmem:[%s5 + $0x8] sm:$0xff]
    %v186 = vld [vmem:[%s5 + $0x10] sm:$0xff]
    %v187 = vld [vmem:[%s5 + $0x18] sm:$0xff]
    %v188 = vld [vmem:[%s6] sm:$0x1]
    %v190 = vperm.slane %v188, 0
    %v193 = vsel %vm152, %v182, 0
    %v196 = vsel %vm152, %v183, 0
    %198 = vmatpush.msra.mxu0 0.0
    %199 = vmatpush.msra.mxu0 0.0
    %200 = vmatpush.msra.mxu0 0.0
    %201 = vmatpush.msra.mxu0 0.0
    %202 = vmatpush.msra.mxu0 0.0
    %203 = vmatpush.msra.mxu0 0.0
    %204 = vmatpush.msra.mxu0 0.0
    %205 = vmatpush.msra.mxu0 0.0
    %206 = vmatpush.msra.mxu0 0.0
    %207 = vmatpush.msra.mxu0 0.0
    %208 = vmatpush.msra.mxu0 0.0
    %209 = vmatpush.msra.mxu0 0.0
    %210 = vmatpush.msra.mxu0 %v187
    %211 = vmatpush.msra.mxu0 %v186
    %212 = vmatpush.msra.mxu0 %v185
    %213 = vmatpush.msra.mxu0 %v184
    %214 = vmatmul.f32.gmra.mxu0 %v193
    %v215 = vpop.f32.mrf.mxu0
    %v216 = vadd.f32 %v190, %v215
    %217 = vmatmul.f32.gmra.mxu0 %v196
    %v218 = vpop.f32.mrf.mxu0
    %v219 = vadd.f32 %v190, %v218
    %220 = vdwg.mxu0
    %v221 = vld [vmem:[%s7] sm:$0x1]
    %v222 = vld [vmem:[%s8] sm:$0x1]
    %vm223 = vcmask 523264
    %v224 = vsel %vm223, %v216, 0.0
    %v225 = vsel %vm223, %v219, 0.0
    %v226 = vadd.f32 %v224, %v225
    %v227 = vrot.slane %v226, 4
    %v228 = vadd.f32 %v226, %v227
    %v229 = vrot.slane %v228, 2
    %v230 = vadd.f32 %v228, %v229
    %v231 = vrot.slane %v230, 1
    %v232 = vadd.f32 %v230, %v231
    %v233 = vmul.f32 %v216, %v216
    %v234 = vmul.f32 %v219, %v219
    %v235 = vsel %vm223, %v233, 0.0
    %v236 = vsel %vm223, %v234, 0.0
    %v237 = vadd.f32 %v235, %v236
    %v238 = vrot.slane %v237, 4
    %v239 = vadd.f32 %v237, %v238
    %v240 = vrot.slane %v239, 2
    %v241 = vadd.f32 %v239, %v240
    %v242 = vrot.slane %v241, 1
    %v243 = vadd.f32 %v241, %v242
    %v244 = vmul.f32 %v232, 0.0625
    %v245 = vmul.f32 %v243, 0.0625
    %v246 = vmul.f32 %v244, %v244
    %v247 = vsub.f32 %v245, %v246
    %v248 = vadd.f32 %v247, 1e-05
    %v249 = vrsqrt.pop %v248
    %v250 = vmul.f32 %v249, %v248
    %v251 = vmul.f32 %v250, %v249
    %v252 = vmul.f32 0.5, %v251
    %v253 = vsub.f32 1.5, %v252
    %v254 = vmul.f32 %v249, %v253
    %vm255 = vweird.f32 %v248
    %vm256 = vweird.f32 %v249
    %vm257 = vmor %vm255, %vm256
    %v258 = vsel %vm257, %v249, %v254
    %v259 = vmul.f32 %v221, %v258
    %v260 = vmul.f32 %v244, %v259
    %v261 = vsub.f32 %v222, %v260
    %v263 = vperm.slane %v259, 0
    %v265 = vmul.f32 %v216, %v263
    %v266 = vmul.f32 %v219, %v263
    %v268 = vperm.slane %v261, 0
    %v270 = vadd.f32 %v265, %v268
    %v271 = vadd.f32 %v266, %v268
    %v272 = vmax.f32 %v270, 0.0
    %v273 = vmax.f32 %v271, 0.0
    %v274 = vld [vmem:[%s9] sm:$0xff]
    %v275 = vld [vmem:[%s9 + $0x8] sm:$0xff]
    %v276 = vld [vmem:[%s9 + $0x10] sm:$0xff]
    %v277 = vld [vmem:[%s9 + $0x18] sm:$0xff]
    %v278 = vld [vmem:[%s9 + $0x20] sm:$0xff]
    %v279 = vld [vmem:[%s9 + $0x28] sm:$0xff]
    %v280 = vld [vmem:[%s9 + $0x30] sm:$0xff]
    %v281 = vld [vmem:[%s9 + $0x38] sm:$0xff]
    %v282 = vld [vmem:[%s10] sm:$0x1]
    %v284 = vperm.slane %v282, 0
    %v287 = vsel %vm223, %v272, 0
    %v290 = vsel %vm223, %v273, 0
    %292 = vmatpush.msra.mxu0 0.0
    %293 = vmatpush.msra.mxu0 0.0
    %294 = vmatpush.msra.mxu0 0.0
    %295 = vmatpush.msra.mxu0 0.0
    %296 = vmatpush.msra.mxu0 0.0
    %297 = vmatpush.msra.mxu0 0.0
    %298 = vmatpush.msra.mxu0 0.0
    %299 = vmatpush.msra.mxu0 0.0
    %300 = vmatpush.msra.mxu0 %v281
    %301 = vmatpush.msra.mxu0 %v280
    %302 = vmatpush.msra.mxu0 %v279
    %303 = vmatpush.msra.mxu0 %v278
    %304 = vmatpush.msra.mxu0 %v277
    %305 = vmatpush.msra.mxu0 %v276
    %306 = vmatpush.msra.mxu0 %v275
    %307 = vmatpush.msra.mxu0 %v274
    %308 = vmatmul.f32.gmra.mxu0 %v287
    %v309 = vpop.f32.mrf.mxu0
    %v310 = vadd.f32 %v284, %v309
    %311 = vmatmul.f32.gmra.mxu0 %v290
    %v312 = vpop.f32.mrf.mxu0
    %v313 = vadd.f32 %v284, %v312
    %314 = vdwg.mxu0
    %v315 = vld [vmem:[%s11] sm:$0x1]
    %v316 = vld [vmem:[%s12] sm:$0x1]
    %v317 = vsel %vm152, %v310, 0.0
    %v318 = vsel %vm152, %v313, 0.0
    %v319 = vadd.f32 %v317, %v318
    %v320 = vrot.slane %v319, 4
    %v321 = vadd.f32 %v319, %v320
    %v322 = vrot.slane %v321, 2
    %v323 = vadd.f32 %v321, %v322
    %v324 = vrot.slane %v323, 1
    %v325 = vadd.f32 %v323, %v324
    %v326 = vmul.f32 %v310, %v310
    %v327 = vmul.f32 %v313, %v313
    %v328 = vsel %vm152, %v326, 0.0
    %v329 = vsel %vm152, %v327, 0.0
    %v330 = vadd.f32 %v328, %v329
    %v331 = vrot.slane %v330, 4
    %v332 = vadd.f32 %v330, %v331
    %v333 = vrot.slane %v332, 2
    %v334 = vadd.f32 %v332, %v333
    %v335 = vrot.slane %v334, 1
    %v336 = vadd.f32 %v334, %v335
    %v337 = vmul.f32 %v325, 0.0625
    %v338 = vmul.f32 %v336, 0.0625
    %v339 = vmul.f32 %v337, %v337
    %v340 = vsub.f32 %v338, %v339
    %v341 = vadd.f32 %v340, 1e-05
    %v342 = vrsqrt.pop %v341
    %v343 = vmul.f32 %v342, %v341
    %v344 = vmul.f32 %v343, %v342
    %v345 = vmul.f32 0.5, %v344
    %v346 = vsub.f32 1.5, %v345
    %v347 = vmul.f32 %v342, %v346
    %vm348 = vweird.f32 %v341
    %vm349 = vweird.f32 %v342
    %vm350 = vmor %vm348, %vm349
    %v351 = vsel %vm350, %v342, %v347
    %v352 = vmul.f32 %v315, %v351
    %v353 = vmul.f32 %v337, %v352
    %v354 = vsub.f32 %v316, %v353
    %v356 = vperm.slane %v352, 0
    %v358 = vmul.f32 %v310, %v356
    %v359 = vmul.f32 %v313, %v356
    %v361 = vperm.slane %v354, 0
    %v363 = vadd.f32 %v358, %v361
    %v364 = vadd.f32 %v359, %v361
    %v365 = vmax.f32 %v363, 0.0
    %v366 = vmax.f32 %v364, 0.0
    %367 = vmatpush.msra.mxu0 0.0
    %368 = vmatpush.msra.mxu0 0.0
    %369 = vmatpush.msra.mxu0 0.0
    %370 = vmatpush.msra.mxu0 0.0
    %371 = vmatpush.msra.mxu0 0.0
    %372 = vmatpush.msra.mxu0 0.0
    %373 = vmatpush.msra.mxu0 0.0
    %374 = vmatpush.msra.mxu0 0.0
    %375 = vmatpush.msra.mxu0 0.0
    %376 = vmatpush.msra.mxu0 0.0
    %377 = vmatpush.msra.mxu0 0.0
    %378 = vmatpush.msra.mxu0 0.0
    %379 = vmatpush.msra.mxu0 0.0
    %380 = vmatpush.msra.mxu0 0.0
    %381 = vmatpush.msra.mxu0 %v366
    %382 = vmatpush.msra.mxu0 %v365
    %383 = vmatmul.f32.gmra.mxu0 %v76
    %v384 = vpop.f32.mrf.mxu0
    %v385 = vadd.f32 %v50, %v384
    %386 = vmatmul.f32.gmra.mxu0 %v79
    %v387 = vpop.f32.mrf.mxu0
    %v388 = vadd.f32 %v51, %v387
    %389 = vmatmul.f32.gmra.mxu0 %v82
    %v390 = vpop.f32.mrf.mxu0
    %v391 = vadd.f32 %v52, %v390
    %392 = vmatmul.f32.gmra.mxu0 %v85
    %v393 = vpop.f32.mrf.mxu0
    %v394 = vadd.f32 %v53, %v393
    %395 = vdwg.mxu0
    %v396 = vmax.f32 %v385, 0.0
    %v397 = vmax.f32 %v388, 0.0
    %v398 = vmax.f32 %v391, 0.0
    %v399 = vmax.f32 %v394, 0.0
    %400 = vmatpush.msra.mxu0 0.0
    %401 = vmatpush.msra.mxu0 0.0
    %402 = vmatpush.msra.mxu0 0.0
    %403 = vmatpush.msra.mxu0 0.0
    %404 = vmatpush.msra.mxu0 0.0
    %405 = vmatpush.msra.mxu0 0.0
    %406 = vmatpush.msra.mxu0 0.0
    %407 = vmatpush.msra.mxu0 0.0
    %408 = vmatpush.msra.mxu0 0.0
    %409 = vmatpush.msra.mxu0 0.0
    %410 = vmatpush.msra.mxu0 0.0
    %411 = vmatpush.msra.mxu0 0.0
    %412 = vmatpush.msra.mxu0 %v399
    %413 = vmatpush.msra.mxu0 %v398
    %414 = vmatpush.msra.mxu0 %v397
    %415 = vmatpush.msra.mxu0 %v396
    %416 = vmatmul.f32.gmra.mxu0 %v154
    %v417 = vpop.f32.mrf.mxu0
    %v418 = vadd.f32 0.0, %v417
    %419 = vmatmul.f32.gmra.mxu0 %v157
    %v420 = vpop.f32.mrf.mxu0
    %v421 = vadd.f32 0.0, %v420
    %422 = vdwg.mxu0
    %v423 = vadd.f32 %v365, %v418
    %v424 = vadd.f32 %v366, %v421
    %s425 = scalar_lea.vmem %s5, 32
    %v426 = vld [vmem:[%s425] sm:$0xff]
    %v427 = vld [vmem:[%s425 + $0x8] sm:$0xff]
    %v428 = vld [vmem:[%s425 + $0x10] sm:$0xff]
    %v429 = vld [vmem:[%s425 + $0x18] sm:$0xff]
    %s430 = scalar_lea.vmem %s6, 1
    %v431 = vld [vmem:[%s430] sm:$0x1]
    %v433 = vperm.slane %v431, 0
    %v436 = vsel %vm152, %v423, 0
    %v439 = vsel %vm152, %v424, 0
    %441 = vmatpush.msra.mxu0 0.0
    %442 = vmatpush.msra.mxu0 0.0
    %443 = vmatpush.msra.mxu0 0.0
    %444 = vmatpush.msra.mxu0 0.0
    %445 = vmatpush.msra.mxu0 0.0
    %446 = vmatpush.msra.mxu0 0.0
    %447 = vmatpush.msra.mxu0 0.0
    %448 = vmatpush.msra.mxu0 0.0
    %449 = vmatpush.msra.mxu0 0.0
    %450 = vmatpush.msra.mxu0 0.0
    %451 = vmatpush.msra.mxu0 0.0
    %452 = vmatpush.msra.mxu0 0.0
    %453 = vmatpush.msra.mxu0 %v429
    %454 = vmatpush.msra.mxu0 %v428
    %455 = vmatpush.msra.mxu0 %v427
    %456 = vmatpush.msra.mxu0 %v426
    %457 = vmatmul.f32.gmra.mxu0 %v436
    %v458 = vpop.f32.mrf.mxu0
    %v459 = vadd.f32 %v433, %v458
    %460 = vmatmul.f32.gmra.mxu0 %v439
    %v461 = vpop.f32.mrf.mxu0
    %v462 = vadd.f32 %v433, %v461
    %463 = vdwg.mxu0
    %s464 = scalar_lea.vmem %s7, 1
    %v465 = vld [vmem:[%s464] sm:$0x1]
    %s466 = scalar_lea.vmem %s8, 1
    %v467 = vld [vmem:[%s466] sm:$0x1]
    %v468 = vsel %vm223, %v459, 0.0
    %v469 = vsel %vm223, %v462, 0.0
    %v470 = vadd.f32 %v468, %v469
    %v471 = vrot.slane %v470, 4
    %v472 = vadd.f32 %v470, %v471
    %v473 = vrot.slane %v472, 2
    %v474 = vadd.f32 %v472, %v473
    %v475 = vrot.slane %v474, 1
    %v476 = vadd.f32 %v474, %v475
    %v477 = vmul.f32 %v459, %v459
    %v478 = vmul.f32 %v462, %v462
    %v479 = vsel %vm223, %v477, 0.0
    %v480 = vsel %vm223, %v478, 0.0
    %v481 = vadd.f32 %v479, %v480
    %v482 = vrot.slane %v481, 4
    %v483 = vadd.f32 %v481, %v482
    %v484 = vrot.slane %v483, 2
    %v485 = vadd.f32 %v483, %v484
    %v486 = vrot.slane %v485, 1
    %v487 = vadd.f32 %v485, %v486
    %v488 = vmul.f32 %v476, 0.0625
    %v489 = vmul.f32 %v487, 0.0625
    %v490 = vmul.f32 %v488, %v488
    %v491 = vsub.f32 %v489, %v490
    %v492 = vadd.f32 %v491, 1e-05
    %v493 = vrsqrt.pop %v492
    %v494 = vmul.f32 %v493, %v492
    %v495 = vmul.f32 %v494, %v493
    %v496 = vmul.f32 0.5, %v495
    %v497 = vsub.f32 1.5, %v496
    %v498 = vmul.f32 %v493, %v497
    %vm499 = vweird.f32 %v492
    %vm500 = vweird.f32 %v493
    %vm501 = vmor %vm499, %vm500
    %v502 = vsel %vm501, %v493, %v498
    %v503 = vmul.f32 %v465, %v502
    %v504 = vmul.f32 %v488, %v503
    %v505 = vsub.f32 %v467, %v504
    %v507 = vperm.slane %v503, 0
    %v509 = vmul.f32 %v459, %v507
    %v510 = vmul.f32 %v462, %v507
    %v512 = vperm.slane %v505, 0
    %v514 = vadd.f32 %v509, %v512
    %v515 = vadd.f32 %v510, %v512
    %v516 = vmax.f32 %v514, 0.0
    %v517 = vmax.f32 %v515, 0.0
    %s518 = scalar_lea.vmem %s9, 64
    %v519 = vld [vmem:[%s518] sm:$0xff]
    %v520 = vld [vmem:[%s518 + $0x8] sm:$0xff]
    %v521 = vld [vmem:[%s518 + $0x10] sm:$0xff]
    %v522 = vld [vmem:[%s518 + $0x18] sm:$0xff]
    %v523 = vld [vmem:[%s518 + $0x20] sm:$0xff]
    %v524 = vld [vmem:[%s518 + $0x28] sm:$0xff]
    %v525 = vld [vmem:[%s518 + $0x30] sm:$0xff]
    %v526 = vld [vmem:[%s518 + $0x38] sm:$0xff]
    %s527 = scalar_lea.vmem %s10, 1
    %v528 = vld [vmem:[%s527] sm:$0x1]
    %v530 = vperm.slane %v528, 0
    %v533 = vsel %vm223, %v516, 0
    %v536 = vsel %vm223, %v517, 0
    %538 = vmatpush.msra.mxu0 0.0
    %539 = vmatpush.msra.mxu0 0.0
    %540 = vmatpush.msra.mxu0 0.0
    %541 = vmatpush.msra.mxu0 0.0
    %542 = vmatpush.msra.mxu0 0.0
    %543 = vmatpush.msra.mxu0 0.0
    %544 = vmatpush.msra.mxu0 0.0
    %545 = vmatpush.msra.mxu0 0.0
    %546 = vmatpush.msra.mxu0 %v526
    %547 = vmatpush.msra.mxu0 %v525
    %548 = vmatpush.msra.mxu0 %v524
    %549 = vmatpush.msra.mxu0 %v523
    %550 = vmatpush.msra.mxu0 %v522
    %551 = vmatpush.msra.mxu0 %v521
    %552 = vmatpush.msra.mxu0 %v520
    %553 = vmatpush.msra.mxu0 %v519
    %554 = vmatmul.f32.gmra.mxu0 %v533
    %v555 = vpop.f32.mrf.mxu0
    %v556 = vadd.f32 %v530, %v555
    %557 = vmatmul.f32.gmra.mxu0 %v536
    %v558 = vpop.f32.mrf.mxu0
    %v559 = vadd.f32 %v530, %v558
    %560 = vdwg.mxu0
    %s561 = scalar_lea.vmem %s11, 1
    %v562 = vld [vmem:[%s561] sm:$0x1]
    %s563 = scalar_lea.vmem %s12, 1
    %v564 = vld [vmem:[%s563] sm:$0x1]
    %v565 = vsel %vm152, %v556, 0.0
    %v566 = vsel %vm152, %v559, 0.0
    %v567 = vadd.f32 %v565, %v566
    %v568 = vrot.slane %v567, 4
    %v569 = vadd.f32 %v567, %v568
    %v570 = vrot.slane %v569, 2
    %v571 = vadd.f32 %v569, %v570
    %v572 = vrot.slane %v571, 1
    %v573 = vadd.f32 %v571, %v572
    %v574 = vmul.f32 %v556, %v556
    %v575 = vmul.f32 %v559, %v559
    %v576 = vsel %vm152, %v574, 0.0
    %v577 = vsel %vm152, %v575, 0.0
    %v578 = vadd.f32 %v576, %v577
    %v579 = vrot.slane %v578, 4
    %v580 = vadd.f32 %v578, %v579
    %v581 = vrot.slane %v580, 2
    %v582 = vadd.f32 %v580, %v581
    %v583 = vrot.slane %v582, 1
    %v584 = vadd.f32 %v582, %v583
    %v585 = vmul.f32 %v573, 0.0625
    %v586 = vmul.f32 %v584, 0.0625
    %v587 = vmul.f32 %v585, %v585
    %v588 = vsub.f32 %v586, %v587
    %v589 = vadd.f32 %v588, 1e-05
    %v590 = vrsqrt.pop %v589
    %v591 = vmul.f32 %v590, %v589
    %v592 = vmul.f32 %v591, %v590
    %v593 = vmul.f32 0.5, %v592
    %v594 = vsub.f32 1.5, %v593
    %v595 = vmul.f32 %v590, %v594
    %vm596 = vweird.f32 %v589
    %vm597 = vweird.f32 %v590
    %vm598 = vmor %vm596, %vm597
    %v599 = vsel %vm598, %v590, %v595
    %v600 = vmul.f32 %v562, %v599
    %v601 = vmul.f32 %v585, %v600
    %v602 = vsub.f32 %v564, %v601
    %v604 = vperm.slane %v600, 0
    %v606 = vmul.f32 %v556, %v604
    %v607 = vmul.f32 %v559, %v604
    %v609 = vperm.slane %v602, 0
    %v611 = vadd.f32 %v606, %v609
    %v612 = vadd.f32 %v607, %v609
    %v613 = vmax.f32 %v611, 0.0
    %v614 = vmax.f32 %v612, 0.0
    %615 = vmatpush.msra.mxu0 0.0
    %616 = vmatpush.msra.mxu0 0.0
    %617 = vmatpush.msra.mxu0 0.0
    %618 = vmatpush.msra.mxu0 0.0
    %619 = vmatpush.msra.mxu0 0.0
    %620 = vmatpush.msra.mxu0 0.0
    %621 = vmatpush.msra.mxu0 0.0
    %622 = vmatpush.msra.mxu0 0.0
    %623 = vmatpush.msra.mxu0 0.0
    %624 = vmatpush.msra.mxu0 0.0
    %625 = vmatpush.msra.mxu0 0.0
    %626 = vmatpush.msra.mxu0 0.0
    %627 = vmatpush.msra.mxu0 0.0
    %628 = vmatpush.msra.mxu0 0.0
    %629 = vmatpush.msra.mxu0 %v614
    %630 = vmatpush.msra.mxu0 %v613
    %631 = vmatmul.f32.gmra.mxu0 %v76
    %v632 = vpop.f32.mrf.mxu0
    %v633 = vadd.f32 %v50, %v632
    %634 = vmatmul.f32.gmra.mxu0 %v79
    %v635 = vpop.f32.mrf.mxu0
    %v636 = vadd.f32 %v51, %v635
    %637 = vmatmul.f32.gmra.mxu0 %v82
    %v638 = vpop.f32.mrf.mxu0
    %v639 = vadd.f32 %v52, %v638
    %640 = vmatmul.f32.gmra.mxu0 %v85
    %v641 = vpop.f32.mrf.mxu0
    %v642 = vadd.f32 %v53, %v641
    %643 = vdwg.mxu0
    %v644 = vmax.f32 %v633, 0.0
    %v645 = vmax.f32 %v636, 0.0
    %v646 = vmax.f32 %v639, 0.0
    %v647 = vmax.f32 %v642, 0.0
    %648 = vmatpush.msra.mxu0 0.0
    %649 = vmatpush.msra.mxu0 0.0
    %650 = vmatpush.msra.mxu0 0.0
    %651 = vmatpush.msra.mxu0 0.0
    %652 = vmatpush.msra.mxu0 0.0
    %653 = vmatpush.msra.mxu0 0.0
    %654 = vmatpush.msra.mxu0 0.0
    %655 = vmatpush.msra.mxu0 0.0
    %656 = vmatpush.msra.mxu0 0.0
    %657 = vmatpush.msra.mxu0 0.0
    %658 = vmatpush.msra.mxu0 0.0
    %659 = vmatpush.msra.mxu0 0.0
    %660 = vmatpush.msra.mxu0 %v647
    %661 = vmatpush.msra.mxu0 %v646
    %662 = vmatpush.msra.mxu0 %v645
    %663 = vmatpush.msra.mxu0 %v644
    %664 = vmatmul.f32.gmra.mxu0 %v154
    %v665 = vpop.f32.mrf.mxu0
    %v666 = vadd.f32 0.0, %v665
    %667 = vmatmul.f32.gmra.mxu0 %v157
    %v668 = vpop.f32.mrf.mxu0
    %v669 = vadd.f32 0.0, %v668
    %670 = vdwg.mxu0
    %v671 = vadd.f32 %v613, %v666
    %v672 = vadd.f32 %v614, %v669
    %s673 = scalar_lea.vmem %s5, 64
    %v674 = vld [vmem:[%s673] sm:$0xff]
    %v675 = vld [vmem:[%s673 + $0x8] sm:$0xff]
    %v676 = vld [vmem:[%s673 + $0x10] sm:$0xff]
    %v677 = vld [vmem:[%s673 + $0x18] sm:$0xff]
    %s678 = scalar_lea.vmem %s6, 2
    %v679 = vld [vmem:[%s678] sm:$0x1]
    %v681 = vperm.slane %v679, 0
    %v684 = vsel %vm152, %v671, 0
    %v687 = vsel %vm152, %v672, 0
    %689 = vmatpush.msra.mxu0 0.0
    %690 = vmatpush.msra.mxu0 0.0
    %691 = vmatpush.msra.mxu0 0.0
    %692 = vmatpush.msra.mxu0 0.0
    %693 = vmatpush.msra.mxu0 0.0
    %694 = vmatpush.msra.mxu0 0.0
    %695 = vmatpush.msra.mxu0 0.0
    %696 = vmatpush.msra.mxu0 0.0
    %697 = vmatpush.msra.mxu0 0.0
    %698 = vmatpush.msra.mxu0 0.0
    %699 = vmatpush.msra.mxu0 0.0
    %700 = vmatpush.msra.mxu0 0.0
    %701 = vmatpush.msra.mxu0 %v677
    %702 = vmatpush.msra.mxu0 %v676
    %703 = vmatpush.msra.mxu0 %v675
    %704 = vmatpush.msra.mxu0 %v674
    %705 = vmatmul.f32.gmra.mxu0 %v684
    %v706 = vpop.f32.mrf.mxu0
    %v707 = vadd.f32 %v681, %v706
    %708 = vmatmul.f32.gmra.mxu0 %v687
    %v709 = vpop.f32.mrf.mxu0
    %v710 = vadd.f32 %v681, %v709
    %711 = vdwg.mxu0
    %s712 = scalar_lea.vmem %s7, 2
    %v713 = vld [vmem:[%s712] sm:$0x1]
    %s714 = scalar_lea.vmem %s8, 2
    %v715 = vld [vmem:[%s714] sm:$0x1]
    %v716 = vsel %vm223, %v707, 0.0
    %v717 = vsel %vm223, %v710, 0.0
    %v718 = vadd.f32 %v716, %v717
    %v719 = vrot.slane %v718, 4
    %v720 = vadd.f32 %v718, %v719
    %v721 = vrot.slane %v720, 2
    %v722 = vadd.f32 %v720, %v721
    %v723 = vrot.slane %v722, 1
    %v724 = vadd.f32 %v722, %v723
    %v725 = vmul.f32 %v707, %v707
    %v726 = vmul.f32 %v710, %v710
    %v727 = vsel %vm223, %v725, 0.0
    %v728 = vsel %vm223, %v726, 0.0
    %v729 = vadd.f32 %v727, %v728
    %v730 = vrot.slane %v729, 4
    %v731 = vadd.f32 %v729, %v730
    %v732 = vrot.slane %v731, 2
    %v733 = vadd.f32 %v731, %v732
    %v734 = vrot.slane %v733, 1
    %v735 = vadd.f32 %v733, %v734
    %v736 = vmul.f32 %v724, 0.0625
    %v737 = vmul.f32 %v735, 0.0625
    %v738 = vmul.f32 %v736, %v736
    %v739 = vsub.f32 %v737, %v738
    %v740 = vadd.f32 %v739, 1e-05
    %v741 = vrsqrt.pop %v740
    %v742 = vmul.f32 %v741, %v740
    %v743 = vmul.f32 %v742, %v741
    %v744 = vmul.f32 0.5, %v743
    %v745 = vsub.f32 1.5, %v744
    %v746 = vmul.f32 %v741, %v745
    %vm747 = vweird.f32 %v740
    %vm748 = vweird.f32 %v741
    %vm749 = vmor %vm747, %vm748
    %v750 = vsel %vm749, %v741, %v746
    %v751 = vmul.f32 %v713, %v750
    %v752 = vmul.f32 %v736, %v751
    %v753 = vsub.f32 %v715, %v752
    %v755 = vperm.slane %v751, 0
    %v757 = vmul.f32 %v707, %v755
    %v758 = vmul.f32 %v710, %v755
    %v760 = vperm.slane %v753, 0
    %v762 = vadd.f32 %v757, %v760
    %v763 = vadd.f32 %v758, %v760
    %v764 = vmax.f32 %v762, 0.0
    %v765 = vmax.f32 %v763, 0.0
    %s766 = scalar_lea.vmem %s9, 128
    %v767 = vld [vmem:[%s766] sm:$0xff]
    %v768 = vld [vmem:[%s766 + $0x8] sm:$0xff]
    %v769 = vld [vmem:[%s766 + $0x10] sm:$0xff]
    %v770 = vld [vmem:[%s766 + $0x18] sm:$0xff]
    %v771 = vld [vmem:[%s766 + $0x20] sm:$0xff]
    %v772 = vld [vmem:[%s766 + $0x28] sm:$0xff]
    %v773 = vld [vmem:[%s766 + $0x30] sm:$0xff]
    %v774 = vld [vmem:[%s766 + $0x38] sm:$0xff]
    %s775 = scalar_lea.vmem %s10, 2
    %v776 = vld [vmem:[%s775] sm:$0x1]
    %v778 = vperm.slane %v776, 0
    %v781 = vsel %vm223, %v764, 0
    %v784 = vsel %vm223, %v765, 0
    %786 = vmatpush.msra.mxu0 0.0
    %787 = vmatpush.msra.mxu0 0.0
    %788 = vmatpush.msra.mxu0 0.0
    %789 = vmatpush.msra.mxu0 0.0
    %790 = vmatpush.msra.mxu0 0.0
    %791 = vmatpush.msra.mxu0 0.0
    %792 = vmatpush.msra.mxu0 0.0
    %793 = vmatpush.msra.mxu0 0.0
    %794 = vmatpush.msra.mxu0 %v774
    %795 = vmatpush.msra.mxu0 %v773
    %796 = vmatpush.msra.mxu0 %v772
    %797 = vmatpush.msra.mxu0 %v771
    %798 = vmatpush.msra.mxu0 %v770
    %799 = vmatpush.msra.mxu0 %v769
    %800 = vmatpush.msra.mxu0 %v768
    %801 = vmatpush.msra.mxu0 %v767
    %802 = vmatmul.f32.gmra.mxu0 %v781
    %v803 = vpop.f32.mrf.mxu0
    %v804 = vadd.f32 %v778, %v803
    %805 = vmatmul.f32.gmra.mxu0 %v784
    %v806 = vpop.f32.mrf.mxu0
    %v807 = vadd.f32 %v778, %v806
    %808 = vdwg.mxu0
    %s809 = scalar_lea.vmem %s11, 2
    %v810 = vld [vmem:[%s809] sm:$0x1]
    %s811 = scalar_lea.vmem %s12, 2
    %v812 = vld [vmem:[%s811] sm:$0x1]
    %v813 = vsel %vm152, %v804, 0.0
    %v814 = vsel %vm152, %v807, 0.0
    %v815 = vadd.f32 %v813, %v814
    %v816 = vrot.slane %v815, 4
    %v817 = vadd.f32 %v815, %v816
    %v818 = vrot.slane %v817, 2
    %v819 = vadd.f32 %v817, %v818
    %v820 = vrot.slane %v819, 1
    %v821 = vadd.f32 %v819, %v820
    %v822 = vmul.f32 %v804, %v804
    %v823 = vmul.f32 %v807, %v807
    %v824 = vsel %vm152, %v822, 0.0
    %v825 = vsel %vm152, %v823, 0.0
    %v826 = vadd.f32 %v824, %v825
    %v827 = vrot.slane %v826, 4
    %v828 = vadd.f32 %v826, %v827
    %v829 = vrot.slane %v828, 2
    %v830 = vadd.f32 %v828, %v829
    %v831 = vrot.slane %v830, 1
    %v832 = vadd.f32 %v830, %v831
    %v833 = vmul.f32 %v821, 0.0625
    %v834 = vmul.f32 %v832, 0.0625
    %v835 = vmul.f32 %v833, %v833
    %v836 = vsub.f32 %v834, %v835
    %v837 = vadd.f32 %v836, 1e-05
    %v838 = vrsqrt.pop %v837
    %v839 = vmul.f32 %v838, %v837
    %v840 = vmul.f32 %v839, %v838
    %v841 = vmul.f32 0.5, %v840
    %v842 = vsub.f32 1.5, %v841
    %v843 = vmul.f32 %v838, %v842
    %vm844 = vweird.f32 %v837
    %vm845 = vweird.f32 %v838
    %vm846 = vmor %vm844, %vm845
    %v847 = vsel %vm846, %v838, %v843
    %v848 = vmul.f32 %v810, %v847
    %v849 = vmul.f32 %v833, %v848
    %v850 = vsub.f32 %v812, %v849
    %v852 = vperm.slane %v848, 0
    %v854 = vmul.f32 %v804, %v852
    %v855 = vmul.f32 %v807, %v852
    %v857 = vperm.slane %v850, 0
    %v859 = vadd.f32 %v854, %v857
    %v860 = vadd.f32 %v855, %v857
    %861 = vst.msk [vmem:[#allocation4] sm:$0xff] %vm152, %v859
    %862 = vst.msk [vmem:[#allocation4 + $0x8] sm:$0xff] %vm152, %v860
    %863 = vxpose.xlu0.b32.start [1/16] %v72, 128
    %864 = vxpose.xlu0.b32.cont [2/16] %v73, 128
    %865 = vxpose.xlu0.b32.cont [3/16] 0.0, 128
    %866 = vxpose.xlu0.b32.cont [4/16] 0.0, 128
    %867 = vxpose.xlu0.b32.cont [5/16] 0.0, 128
    %868 = vxpose.xlu0.b32.cont [6/16] 0.0, 128
    %869 = vxpose.xlu0.b32.cont [7/16] 0.0, 128
    %870 = vxpose.xlu0.b32.cont [8/16] 0.0, 128
    %871 = vxpose.xlu0.b32.cont [9/16] 0.0, 128
    %872 = vxpose.xlu0.b32.cont [10/16] 0.0, 128
    %873 = vxpose.xlu0.b32.cont [11/16] 0.0, 128
    %874 = vxpose.xlu0.b32.cont [12/16] 0.0, 128
    %875 = vxpose.xlu0.b32.cont [13/16] 0.0, 128
    %876 = vxpose.xlu0.b32.cont [14/16] 0.0, 128
    %877 = vxpose.xlu0.b32.cont [15/16] 0.0, 128
    %878 = vxpose.xlu0.b32.end [16/16] 0.0, 128
    %v879 = vpop.trf.xlu0
    %v880 = vpop.trf.xlu0
    %v881 = vpop.trf.xlu0
    %v882 = vpop.trf.xlu0
    %v883 = vpop.trf.xlu0
    %v884 = vpop.trf.xlu0
    %v885 = vpop.trf.xlu0
    %v886 = vpop.trf.xlu0
    %v887 = vpop.trf.xlu0
    %v888 = vpop.trf.xlu0
    %v889 = vpop.trf.xlu0
    %v890 = vpop.trf.xlu0
    %v891 = vpop.trf.xlu0
    %v892 = vpop.trf.xlu0
    %v893 = vpop.trf.xlu0
    %v894 = vpop.trf.xlu0
    %v896 = vsel %vm74, %v879, 0
    %898 = vmatpush.msra.mxu0 0.0
    %899 = vmatpush.msra.mxu0 0.0
    %900 = vmatpush.msra.mxu0 0.0
    %901 = vmatpush.msra.mxu0 0.0
    %902 = vmatpush.msra.mxu0 0.0
    %903 = vmatpush.msra.mxu0 0.0
    %904 = vmatpush.msra.mxu0 0.0
    %905 = vmatpush.msra.mxu0 0.0
    %906 = vmatpush.msra.mxu0 0.0
    %907 = vmatpush.msra.mxu0 0.0
    %908 = vmatpush.msra.mxu0 0.0
    %909 = vmatpush.msra.mxu0 0.0
    %910 = vmatpush.msra.mxu0 0.0
    %911 = vmatpush.msra.mxu0 0.0
    %912 = vmatpush.msra.mxu0 %v860
    %913 = vmatpush.msra.mxu0 %v859
    %914 = vmatmul.f32.gmra.mxu0 %v896
    %v915 = vpop.f32.mrf.mxu0
    %v916 = vadd.f32 0.0, %v915
    %917 = vdwg.mxu0
    %vm918 = vcmask 254976
    %919 = vst.msk [vmem:[#allocation2] sm:$0x3] %vm918, %v916
    // Predicated region
    $region54: #{tpu_custom_call.1} parent=1 // pred_check
      _
    $region55: #{tpu_custom_call.1} parent=1 // pred_check_branch
      %921 = sbr.rel (0) target = $region57
    $region56: #{tpu_custom_call.1} parent=1 // pred_region
      %923 = vsyncadd [#allocation3], 0
      %s925 = sshll.u32 [#allocation2], 4
      %s926 = int_to_ptr.vmem [resolvable:$true] %s925
      %s927 = sshll.u32 %s13, 4
      %s928 = int_to_ptr.hbm [resolvable:$true] %s927
      %930 = dma.vmem_to_hbm [thread:$0]  %s926, 32, %s928, [#allocation3]
    $region57: #{tpu_custom_call.1} parent=1 // pred_fallthru
      _
    // Predicated region
    $region58: #{tpu_custom_call.1} parent=1 // pred_check
      _
    $region59: #{tpu_custom_call.1} parent=1 // pred_check_branch
      %932 = sbr.rel (0) target = $region61
    $region60: #{tpu_custom_call.1} parent=1 // pred_region
      %934 = vsyncadd [#allocation5], 0
      %s935 = sshll.u32 [#allocation4], 4
      %s936 = int_to_ptr.vmem [resolvable:$true] %s935
      %s937 = sshll.u32 %s14, 4
      %s938 = int_to_ptr.hbm [resolvable:$true] %s937
      %943 = dma.vmem_to_hbm [thread:$0]  %s936, 256, %s938, [#allocation5], 128, 128, 8
    $region61: #{tpu_custom_call.1} parent=1 // pred_fallthru
      _
    // Predicated region
    $region62: #{tpu_custom_call.1} parent=1 // pred_check
      _
    $region63: #{tpu_custom_call.1} parent=1 // pred_check_branch
      %945 = sbr.rel (0) target = $region65
    $region64: #{tpu_custom_call.1} parent=1 // pred_region
      %947 = dma.done [#allocation3], 32
    $region65: #{tpu_custom_call.1} parent=1 // pred_fallthru
      _
    // Predicated region
    $region66: #{tpu_custom_call.1} parent=1 // pred_check
      _
    $region67: #{tpu_custom_call.1} parent=1 // pred_check_branch
      %949 = sbr.rel (0) target = $region69
    $region68: #{tpu_custom_call.1} parent=1 // pred_region
      %951 = dma.done [#allocation5], 256
    $region69: #{tpu_custom_call.1} parent=1 // pred_fallthru
      _
    %952 = vsyncpa [#allocation3], 1
    %953 = vsyncpa [#allocation5], 1

</llo_original>
